<compile_context>
chip_gen: v7x
topology: tpu7x:2x2x1
jax: 0.10.0
libtpu: 0.0.40
codegen_flags: <defaults>
</compile_context>

<pallas_src>
import math
import functools

import numpy as np
import jax
import jax.numpy as jnp
from jax.experimental import pallas as pl
from jax.experimental.pallas import tpu as pltpu


def _wing_loss_kernel(pred_ref, tgt_ref, b1_ref, ssum_ref, out_ref, acc_ref, *,
                      omega, epsilon, fac, n_valid, num_tiles):
    c = pl.program_id(0)                   # parallel axis (core split on v7x)
    t = pl.program_id(1)                   # reduction axis (sequential per core)
    t_per = pl.num_programs(1)
    blk = c * t_per + t                    # raw (unclamped) block index along M

    @pl.when(t == 0)
    def _init():
        acc_ref[...] = jnp.zeros_like(acc_ref)

    # ---- softmax(pred, 1)[:, 1] on dense vregs ------------------------------
    x = pred_ref[...].astype(jnp.float32)                         # (tm, 128)
    # broadcast each sample's class-1 logit over its C lanes (one MXU matmul)
    p1 = jnp.dot(x, b1_ref[...], preferred_element_type=jnp.float32)
    # normalize against the class-1 logit: no max reduce needed; clamp the
    # exponent so a pathological logit can never poison the row via inf*0.
    e = jnp.exp(jnp.minimum(x - p1, 80.0))                        # class-1 lane -> 1
    # per-sample softmax denominator, aligned with the (tm, G) target layout
    d = jnp.dot(e, ssum_ref[...], preferred_element_type=jnp.float32)   # (tm, G), >= 1
    r = pl.reciprocal(d, approx=True)
    y_hat = r * (2.0 - d * r)                                     # one Newton step -> ~f32 exact

    # ---- wing loss -----------------------------------------------------------
    y = tgt_ref[...].astype(jnp.float32)                          # (tm, G)
    delta = fac * jnp.abs(y - y_hat)
    c_const = omega - omega * math.log(1.0 + omega / epsilon)
    loss = jnp.where(delta < omega,
                     omega * jnp.log(1.0 + delta * (1.0 / epsilon)),
                     delta - c_const)

    # steady-state blocks: no padding, accumulate unmasked
    @pl.when(blk < num_tiles - 1)
    def _acc_steady():
        acc_ref[...] += loss

    # tail block only: mask samples >= n_valid (flat padding / partial block).
    # Duplicated clamped blocks (blk >= num_tiles) fall through both branches.
    @pl.when(blk == num_tiles - 1)
    def _acc_tail():
        tm, g = loss.shape
        row = jax.lax.broadcasted_iota(jnp.int32, (tm, g), 0)
        col = jax.lax.broadcasted_iota(jnp.int32, (tm, g), 1)
        sample = ((num_tiles - 1) * tm + row) * g + col
        acc_ref[...] += jnp.where(sample < n_valid, loss, 0.0)

    # one full reduce per core, written to that core's output slab
    @pl.when(t == t_per - 1)
    def _finalize():
        out_ref[...] = jnp.broadcast_to(jnp.sum(acc_ref[...]), out_ref.shape)


def wing_loss(pred, target, omega=10.0, epsilon=2.0, fac=1.0, tile_m=4096):
    """pred: (N, C) float (f32 or bf16); target: (N,) float.  Returns scalar f32."""
    N, C = pred.shape
    # TODO(synk): C > 128 would need multi-row samples; not implemented.
    assert 2 <= C <= 128, "WingLoss indexes class 1 of the softmax; C <= 128 supported"
    n_valid = N

    # Pad the class dim up to a divisor of 128 with a softmax-neutral logit so a
    # whole number of samples fits in each 128-lane row (no-op for C = 2/4/8/...).
    if 128 % C != 0:
        cp = next(d for d in (2, 4, 8, 16, 32, 64, 128) if d >= C)
        pred = jnp.pad(pred, ((0, 0), (0, cp - C)), constant_values=-1e30)
        C = cp
    G = 128 // C                           # samples per 128-lane row

    flat = N * C
    if flat % 128 == 0 and flat // 128 >= 8:
        M = flat // 128
        pred2d = jnp.reshape(pred, (M, 128))        # zero-copy row-major view
        tgt2d = jnp.reshape(target, (M, G))         # zero-copy (M*G == N here)
    else:
        # TODO(synk): this tail pad re-materializes pred once; feed batches with
        # N*C % 128 == 0 to keep the input path zero-copy.
        M = pl.cdiv(pl.cdiv(flat, 128), 8) * 8
        pred2d = jnp.pad(jnp.reshape(pred, (-1,)), (0, M * 128 - flat)).reshape(M, 128)
        tgt2d = jnp.pad(jnp.reshape(target, (-1,)), (0, M * G - N)).reshape(M, G)

    # Static 0/1 selector matrices (tiny, resident in VMEM):
    #   b1[l, l']  = 1 iff l is the class-1 lane of l''s sample group
    #   ssum[l, g] = 1 iff lane l belongs to sample group g
    lane = np.arange(128)
    grp = lane // C
    b1 = ((grp[:, None] == grp[None, :]) & ((lane % C) == 1)[:, None]).astype(np.float32)
    ssum = (grp[:, None] == np.arange(G)[None, :]).astype(np.float32)

    # Tiling: sublane-aligned row tiles; last block may be partial (masked).
    tile_m = max(8, (tile_m // 8) * 8)
    tm = min(tile_m, (M // 8) * 8)
    num_tiles = pl.cdiv(M, tm)
    n_par = 2 if num_tiles >= 2 else 1     # one partial sum per TensorCore on v7x
    t_par = pl.cdiv(num_tiles, n_par)

    def data_map(c, t):                    # clamp: overshoot re-reads the last block
        return (jnp.minimum(c * t_par + t, num_tiles - 1), 0)

    kernel = functools.partial(
        _wing_loss_kernel,
        omega=float(omega), epsilon=float(epsilon), fac=float(fac),
        n_valid=n_valid, num_tiles=num_tiles,
    )

    out = pl.pallas_call(
        kernel,
        out_shape=jax.ShapeDtypeStruct((n_par, 8, 128), jnp.float32),
        grid_spec=pltpu.PrefetchScalarGridSpec(
            num_scalar_prefetch=0,
            grid=(n_par, t_par),
            in_specs=[
                pl.BlockSpec((tm, 128), data_map),               # pred rows (dense)
                pl.BlockSpec((tm, G), data_map),                 # targets
                pl.BlockSpec((128, 128), lambda c, t: (0, 0)),   # b1 selector
                pl.BlockSpec((128, G), lambda c, t: (0, 0)),     # ssum selector
            ],
            out_specs=pl.BlockSpec((1, 8, 128), lambda c, t: (c, 0, 0)),
            scratch_shapes=[pltpu.VMEM((tm, G), jnp.float32)],   # vector accumulator
        ),
        compiler_params=pltpu.CompilerParams(
            dimension_semantics=("parallel", "arbitrary"),
            vmem_limit_bytes=48 * 1024 * 1024,
        ),
    )(pred2d, tgt2d, jnp.asarray(b1), jnp.asarray(ssum))

    # mean over the N valid samples; sum the per-core partials on the host
    return jnp.sum(out[:, 0, 0]) / n_valid


if __name__ == "__main__":
    key = jax.random.PRNGKey(0)
    ks = jax.random.split(key, 10)

    def reference(pred, target, omega=10.0, epsilon=2.0, fac=1.0):
        y_hat = jax.nn.softmax(pred.astype(jnp.float32), axis=1)[:, 1]
        d = fac * jnp.abs(target.astype(jnp.float32) - y_hat)
        c = omega - omega * math.log(1.0 + omega / epsilon)
        return jnp.mean(jnp.where(d < omega, omega * jnp.log(1.0 + d / epsilon), d - c))

    def check(n, c, ka, kb, fac=1.0, **kw):
        p = jax.random.normal(ka, (n, c), dtype=jnp.float32)
        y = jax.random.uniform(kb, (n,), dtype=jnp.float32)
        got = wing_loss(p, y, fac=fac, **kw)
        jax.block_until_ready(got)
        want = reference(p, y, fac=fac)
        assert jnp.allclose(got, want, rtol=1e-5, atol=1e-6), (n, c, got, want)

    check(8, 4, ks[0], ks[1])                    # tiny batch, padded-tail path
    check(300, 4, ks[2], ks[3])                  # unaligned flat length -> pad fallback
    check(1024, 4, ks[4], ks[5])                 # zero-copy reshape path, single tile
    check(1280, 4, ks[6], ks[7], tile_m=16)      # multi-tile, 2-way split, odd tiles + partial tail
    check(512, 2, ks[8], ks[9], fac=25.0)        # C=2, zero-copy, exercises delta >= omega branch

    print("KERNEL_OK")
</pallas_src>

<mosaic_0001>
module attributes {stable_mosaic.version = 11 : i64} {
  func.func @_wing_loss_kernel(%arg0: i32, %arg1: i32, %arg2: memref<8x128xf32, #tpu.memory_space<vmem>>, %arg3: memref<8x32xf32, #tpu.memory_space<vmem>>, %arg4: memref<128x128xf32, #tpu.memory_space<vmem>>, %arg5: memref<128x32xf32, #tpu.memory_space<vmem>>, %arg6: memref<1x8x128xf32, #tpu.memory_space<vmem>>, %arg7: memref<8x32xf32, #tpu.memory_space<vmem>>) attributes {dimension_semantics = [#tpu.dimension_semantics<parallel>, #tpu.dimension_semantics<arbitrary>], iteration_bounds = array<i64: 1, 1>, scalar_prefetch = 0 : i64, scratch_operands = 1 : i64, tpu.core_type = #tpu.core_type<tc>, window_params = [{transform_indices = @transform_0, window_bounds = array<i64: 8, 128>}, {transform_indices = @transform_1, window_bounds = array<i64: 8, 32>}, {pipeline_mode = #tpu.pipeline_mode<synchronous>, transform_indices = @transform_2, window_bounds = array<i64: 128, 128>}, {pipeline_mode = #tpu.pipeline_mode<synchronous>, transform_indices = @transform_3, window_bounds = array<i64: 128, 32>}, {transform_indices = @transform_4, window_bounds = array<i64: 1, 8, 128>}]} {
    %c1_i32 = arith.constant 1 : i32
    %0 = arith.muli %arg0, %c1_i32 : i32
    %1 = arith.addi %0, %arg1 : i32
    %c0_i32 = arith.constant 0 : i32
    %2 = arith.cmpi eq, %arg1, %c0_i32 : i32
    %3 = arith.extui %2 : i1 to i32
    %c0_i32_0 = arith.constant 0 : i32
    %4 = arith.cmpi ne, %3, %c0_i32_0 : i32
    scf.if %4 {
      %cst_23 = arith.constant 0.000000e+00 : f32
      %45 = vector.broadcast %cst_23 : f32 to vector<8x32xf32>
      %c0_24 = arith.constant 0 : index
      %c0_25 = arith.constant 0 : index
      %46 = vector.load %arg7[%c0_24, %c0_25] : memref<8x32xf32, #tpu.memory_space<vmem>>, vector<8x32xf32>
      tpu.vector_store %arg7[%c0_24, %c0_25], %45 {strides = array<i32>} : memref<8x32xf32, #tpu.memory_space<vmem>>, vector<8x32xf32>,
    } else {
    }
    %c0 = arith.constant 0 : index
    %c0_1 = arith.constant 0 : index
    %5 = vector.load %arg2[%c0, %c0_1] : memref<8x128xf32, #tpu.memory_space<vmem>>, vector<8x128xf32>
    %c0_2 = arith.constant 0 : index
    %c0_3 = arith.constant 0 : index
    %6 = vector.load %arg4[%c0_2, %c0_3] : memref<128x128xf32, #tpu.memory_space<vmem>>, vector<128x128xf32>
    %cst = arith.constant dense<0.000000e+00> : vector<8x128xf32>
    %7 = tpu.matmul %5, %6, %cst {dimension_numbers = #tpu.dot_dimension_numbers<[1], [0], [0], [1], [0, 0, 1, 1], [], []>} : vector<8x128xf32>, vector<128x128xf32>, vector<8x128xf32> -> vector<8x128xf32>
    %8 = arith.subf %5, %7 : vector<8x128xf32>
    %cst_4 = arith.constant 8.000000e+01 : f32
    %9 = vector.broadcast %cst_4 : f32 to vector<8x128xf32>
    %10 = arith.minimumf %8, %9 : vector<8x128xf32>
    %11 = math.exp %10 : vector<8x128xf32>
    %c0_5 = arith.constant 0 : index
    %c0_6 = arith.constant 0 : index
    %12 = vector.load %arg5[%c0_5, %c0_6] : memref<128x32xf32, #tpu.memory_space<vmem>>, vector<128x32xf32>
    %cst_7 = arith.constant dense<0.000000e+00> : vector<8x32xf32>
    %13 = tpu.matmul %11, %12, %cst_7 {dimension_numbers = #tpu.dot_dimension_numbers<[1], [0], [0], [1], [0, 0, 1, 1], [], []>} : vector<8x128xf32>, vector<128x32xf32>, vector<8x32xf32> -> vector<8x32xf32>
    %14 = tpu.reciprocal %13 {approx = true} : vector<8x32xf32> -> vector<8x32xf32>
    %15 = arith.mulf %13, %14 : vector<8x32xf32>
    %cst_8 = arith.constant 2.000000e+00 : f32
    %16 = vector.broadcast %cst_8 : f32 to vector<8x32xf32>
    %17 = arith.subf %16, %15 : vector<8x32xf32>
    %18 = arith.mulf %14, %17 : vector<8x32xf32>
    %c0_9 = arith.constant 0 : index
    %c0_10 = arith.constant 0 : index
    %19 = vector.load %arg3[%c0_9, %c0_10] : memref<8x32xf32, #tpu.memory_space<vmem>>, vector<8x32xf32>
    %20 = arith.subf %19, %18 : vector<8x32xf32>
    %21 = math.absf %20 : vector<8x32xf32>
    %cst_11 = arith.constant 1.000000e+00 : f32
    %22 = vector.broadcast %cst_11 : f32 to vector<8x32xf32>
    %23 = arith.mulf %22, %21 : vector<8x32xf32>
    %cst_12 = arith.constant 1.000000e+01 : f32
    %24 = vector.broadcast %cst_12 : f32 to vector<8x32xf32>
    %25 = arith.cmpf olt, %23, %24 : vector<8x32xf32>
    %cst_13 = arith.constant 5.000000e-01 : f32
    %26 = vector.broadcast %cst_13 : f32 to vector<8x32xf32>
    %27 = arith.mulf %23, %26 : vector<8x32xf32>
    %cst_14 = arith.constant 1.000000e+00 : f32
    %28 = vector.broadcast %cst_14 : f32 to vector<8x32xf32>
    %29 = arith.addf %28, %27 : vector<8x32xf32>
    %30 = math.log %29 : vector<8x32xf32>
    %cst_15 = arith.constant 1.000000e+01 : f32
    %31 = vector.broadcast %cst_15 : f32 to vector<8x32xf32>
    %32 = arith.mulf %31, %30 : vector<8x32xf32>
    %cst_16 = arith.constant -7.9175949 : f32
    %33 = vector.broadcast %cst_16 : f32 to vector<8x32xf32>
    %34 = arith.subf %23, %33 : vector<8x32xf32>
    %35 = arith.select %25, %32, %34 : vector<8x32xi1>, vector<8x32xf32>
    %c0_i32_17 = arith.constant 0 : i32
    %36 = arith.cmpi slt, %1, %c0_i32_17 : i32
    %37 = arith.extui %36 : i1 to i32
    %c0_i32_18 = arith.constant 0 : i32
    %38 = arith.cmpi ne, %37, %c0_i32_18 : i32
    scf.if %38 {
      %c0_23 = arith.constant 0 : index
      %c0_24 = arith.constant 0 : index
      %45 = vector.load %arg7[%c0_23, %c0_24] : memref<8x32xf32, #tpu.memory_space<vmem>>, vector<8x32xf32>
      %46 = arith.addf %45, %35 : vector<8x32xf32>
      %c0_25 = arith.constant 0 : index
      %c0_26 = arith.constant 0 : index
      %47 = vector.load %arg7[%c0_25, %c0_26] : memref<8x32xf32, #tpu.memory_space<vmem>>, vector<8x32xf32>
      tpu.vector_store %arg7[%c0_25, %c0_26], %46 {strides = array<i32>} : memref<8x32xf32, #tpu.memory_space<vmem>>, vector<8x32xf32>,
    } else {
    }
    %c0_i32_19 = arith.constant 0 : i32
    %39 = arith.cmpi eq, %1, %c0_i32_19 : i32
    %40 = arith.extui %39 : i1 to i32
    %c0_i32_20 = arith.constant 0 : i32
    %41 = arith.cmpi ne, %40, %c0_i32_20 : i32
    scf.if %41 {
      %45 = tpu.iota {dimensions = array<i32: 0>} : vector<8x32xi32>
      %46 = tpu.iota {dimensions = array<i32: 1>} : vector<8x32xi32>
      %c0_i32_23 = arith.constant 0 : i32
      %47 = vector.broadcast %c0_i32_23 : i32 to vector<8x32xi32>
      %48 = arith.addi %47, %45 : vector<8x32xi32>
      %c32_i32 = arith.constant 32 : i32
      %49 = vector.broadcast %c32_i32 : i32 to vector<8x32xi32>
      %50 = arith.muli %48, %49 : vector<8x32xi32>
      %51 = arith.addi %50, %46 : vector<8x32xi32>
      %c0_24 = arith.constant 0 : index
      %c0_25 = arith.constant 0 : index
      %52 = vector.load %arg7[%c0_24, %c0_25] : memref<8x32xf32, #tpu.memory_space<vmem>>, vector<8x32xf32>
      %c8_i32 = arith.constant 8 : i32
      %53 = vector.broadcast %c8_i32 : i32 to vector<8x32xi32>
      %54 = arith.cmpi slt, %51, %53 : vector<8x32xi32>
      %cst_26 = arith.constant 0.000000e+00 : f32
      %55 = vector.broadcast %cst_26 : f32 to vector<8x32xf32>
      %56 = arith.select %54, %35, %55 : vector<8x32xi1>, vector<8x32xf32>
      %57 = arith.addf %52, %56 : vector<8x32xf32>
      %c0_27 = arith.constant 0 : index
      %c0_28 = arith.constant 0 : index
      %58 = vector.load %arg7[%c0_27, %c0_28] : memref<8x32xf32, #tpu.memory_space<vmem>>, vector<8x32xf32>
      tpu.vector_store %arg7[%c0_27, %c0_28], %57 {strides = array<i32>} : memref<8x32xf32, #tpu.memory_space<vmem>>, vector<8x32xf32>,
    } else {
    }
    %c0_i32_21 = arith.constant 0 : i32
    %42 = arith.cmpi eq, %arg1, %c0_i32_21 : i32
    %43 = arith.extui %42 : i1 to i32
    %c0_i32_22 = arith.constant 0 : i32
    %44 = arith.cmpi ne, %43, %c0_i32_22 : i32
    scf.if %44 {
      %c0_23 = arith.constant 0 : index
      %c0_24 = arith.constant 0 : index
      %45 = vector.load %arg7[%c0_23, %c0_24] : memref<8x32xf32, #tpu.memory_space<vmem>>, vector<8x32xf32>
      %46 = vector.shape_cast %45 : vector<8x32xf32> to vector<1x8x32xf32>
      %cst_25 = arith.constant dense<0.000000e+00> : vector<1xf32>
      %47 = vector.multi_reduction <add>, %46, %cst_25 [1, 2] : vector<1x8x32xf32> to vector<1xf32>
      %48 = vector.shape_cast %47 : vector<1xf32> to vector<1x1x1xf32>
      %49 = vector.extract %48[0, 0, 0] : f32 from vector<1x1x1xf32>
      %50 = vector.broadcast %49 : f32 to vector<1x8x128xf32>
      %c0_26 = arith.constant 0 : index
      %c0_27 = arith.constant 0 : index
      %c0_28 = arith.constant 0 : index
      %51 = vector.load %arg6[%c0_26, %c0_27, %c0_28] : memref<1x8x128xf32, #tpu.memory_space<vmem>>, vector<1x8x128xf32>
      tpu.vector_store %arg6[%c0_26, %c0_27, %c0_28], %50 {strides = array<i32>} : memref<1x8x128xf32, #tpu.memory_space<vmem>>, vector<1x8x128xf32>,
    } else {
    }
    return
  }
  func.func @transform_0(%arg0: i32, %arg1: i32) -> (i32, i32) {
    %c1_i32 = arith.constant 1 : i32
    %0 = arith.muli %arg0, %c1_i32 : i32
    %1 = arith.addi %0, %arg1 : i32
    %c0_i32 = arith.constant 0 : i32
    %2 = arith.minsi %1, %c0_i32 : i32
    %c0_i32_0 = arith.constant 0 : i32
    %c0_i32_1 = arith.constant 0 : i32
    return %2, %c0_i32_0 : i32, i32
  }
  func.func @transform_1(%arg0: i32, %arg1: i32) -> (i32, i32) {
    %c1_i32 = arith.constant 1 : i32
    %0 = arith.muli %arg0, %c1_i32 : i32
    %1 = arith.addi %0, %arg1 : i32
    %c0_i32 = arith.constant 0 : i32
    %2 = arith.minsi %1, %c0_i32 : i32
    %c0_i32_0 = arith.constant 0 : i32
    %c0_i32_1 = arith.constant 0 : i32
    return %2, %c0_i32_0 : i32, i32
  }
  func.func @transform_2(%arg0: i32, %arg1: i32) -> (i32, i32) {
    %c0_i32 = arith.constant 0 : i32
    %c0_i32_0 = arith.constant 0 : i32
    %c0_i32_1 = arith.constant 0 : i32
    return %c0_i32, %c0_i32_0 : i32, i32
  }
  func.func @transform_3(%arg0: i32, %arg1: i32) -> (i32, i32) {
    %c0_i32 = arith.constant 0 : i32
    %c0_i32_0 = arith.constant 0 : i32
    %c0_i32_1 = arith.constant 0 : i32
    return %c0_i32, %c0_i32_0 : i32, i32
  }
  func.func @transform_4(%arg0: i32, %arg1: i32) -> (i32, i32, i32) {
    %c0_i32 = arith.constant 0 : i32
    %c0_i32_0 = arith.constant 0 : i32
    %c0_i32_1 = arith.constant 0 : i32
    return %arg0, %c0_i32, %c0_i32_0 : i32, i32, i32
  }
}

</mosaic_0001>

<llo_original>
// kernel: tpu_custom_call.1
$region0: #{tpu_custom_call.1}
  #allocation0 [shape = 'u32[]', space=smem, size = 0x4, offset = 0x4, fixed_abs, tag = 'smem constant byte address 0x4 - core index']
  #allocation1 [shape = 'u32[144,128]{1,0:T(1,128)}', space=vmem, size = 0x12000, scoped, tag = 'internal scratch']
  #allocation2 [shape = 'f32[8,32]{1,0:T(8,128)}', space=vmem, size = 0x1000, scoped, tag = 'scratch operand']
  %s0 = inlined_call_operand.vmem [shape: f32[8,128], index: 0, kind: input, shape index: {}]
  %s1 = inlined_call_operand.vmem [shape: f32[8,32], index: 1, kind: input, shape index: {}]
  %s2 = inlined_call_operand.vmem [shape: f32[128,128], index: 2, kind: input, shape index: {}]
  %s3 = inlined_call_operand.vmem [shape: f32[128,32], index: 3, kind: input, shape index: {}]
  %s4 = inlined_call_operand.hbm [shape: f32[1,8,128], index: 4, kind: output, shape index: {}]
  %s5 = sld [smem:[#allocation0]]
  $region42: #{tpu_custom_call.1} parent=0
    _
  %s7 = ssub.s32 1, %s5
  %s8 = scalar_select 0, %s7, %s5
  $region1: #{tpu_custom_call.1} parent=0
    #allocation3 [shape = 'u8[4096]{0}', space=vmem, size = 0x1000, scoped, tag = 'output window, operand 0, single buffered']
    #allocation4 [shape = 's32[1]{0}', space=sflag, size = 0x4, scoped, tag = 'scoped memory for tpu_custom_call.1']
    %9 = vsyncpa [#allocation4], 0
    // Predicated region
    $region2: #{tpu_custom_call.1} parent=1 // pred_check
      _
    $region3: #{tpu_custom_call.1} parent=1 // pred_check_branch
      %11 = sbr.rel (0) target = $region5
    $region4: #{tpu_custom_call.1} parent=1 // pred_region
      %s12 = sadd.s32 0, 0
      %p13 = scmp.lt.s32.totalorder %s12, 0
      %s14 = scalar_select %p13, %s12, 0
      %p15 = scmp.lt.s32.totalorder %s14, 0
      %s16 = scalar_select %p15, %s14, 0
      %s17 = smul.addr %s16, 8
      %s18 = scalar_lea.vmem %s0, %s17
      %s19 = sadd.s32 0, 0
      %p20 = scmp.lt.s32.totalorder %s19, 0
      %s21 = scalar_select %p20, %s19, 0
    $region5: #{tpu_custom_call.1} parent=1 // pred_fallthru
      _
    // Predicated region
    $region6: #{tpu_custom_call.1} parent=1 // pred_check
      _
    $region7: #{tpu_custom_call.1} parent=1 // pred_check_branch
      %23 = sbr.rel (0) target = $region9
    $region8: #{tpu_custom_call.1} parent=1 // pred_region
      %s24 = sadd.s32 0, 0
      %p25 = scmp.lt.s32.totalorder %s24, 0
      %s26 = scalar_select %p25, %s24, 0
      %p27 = scmp.lt.s32.totalorder %s26, 0
      %s28 = scalar_select %p27, %s26, 0
      %s29 = smul.addr %s28, 8
      %s30 = scalar_lea.vmem %s1, %s29
      %s31 = sadd.s32 0, 0
      %p32 = scmp.lt.s32.totalorder %s31, 0
      %s33 = scalar_select %p32, %s31, 0
    $region9: #{tpu_custom_call.1} parent=1 // pred_fallthru
      _
    // Predicated region
    $region10: #{tpu_custom_call.1} parent=1 // pred_check
      _
    $region11: #{tpu_custom_call.1} parent=1 // pred_check_branch
      %35 = sbr.rel (0) target = $region13
    $region12: #{tpu_custom_call.1} parent=1 // pred_region
      _
    $region13: #{tpu_custom_call.1} parent=1 // pred_fallthru
      _
    // Predicated region
    $region14: #{tpu_custom_call.1} parent=1 // pred_check
      _
    $region15: #{tpu_custom_call.1} parent=1 // pred_check_branch
      %37 = sbr.rel (0) target = $region17
    $region16: #{tpu_custom_call.1} parent=1 // pred_region
      _
    $region17: #{tpu_custom_call.1} parent=1 // pred_fallthru
      _
    %s38 = sadd.s32 0, 0
    %p39 = scmp.lt.s32.totalorder %s38, 0
    %s40 = scalar_select %p39, %s38, 0
    %p41 = scmp.lt.s32.totalorder %s40, 0
    %s42 = scalar_select %p41, %s40, 0
    %s43 = smul.addr %s42, 8
    %s44 = scalar_lea.vmem %s0, %s43
    %s45 = sadd.s32 0, 0
    %p46 = scmp.lt.s32.totalorder %s45, 0
    %s47 = scalar_select %p46, %s45, 0
    %p48 = scmp.lt.s32.totalorder %s47, 0
    %s49 = scalar_select %p48, %s47, 0
    %s50 = smul.addr %s49, 8
    %s51 = scalar_lea.vmem %s1, %s50
    %s52 = sadd.s32 0, 0
    %p53 = scmp.lt.s32.totalorder %s52, 0
    %s54 = scalar_select %p53, %s52, 0
    %p55 = scmp.lt.s32.totalorder %s54, 0
    %s56 = scalar_select %p55, %s54, 0
    %s57 = smul.addr %s56, 8
    %s58 = scalar_lea.vmem %s0, %s57
    %s59 = sadd.s32 0, 0
    %p60 = scmp.lt.s32.totalorder %s59, 0
    %s61 = scalar_select %p60, %s59, 0
    %s62 = sadd.s32 0, 0
    %p63 = scmp.lt.s32.totalorder %s62, 0
    %s64 = scalar_select %p63, %s62, 0
    %p65 = scmp.lt.s32.totalorder %s64, 0
    %s66 = scalar_select %p65, %s64, 0
    %s67 = smul.addr %s66, 8
    %s68 = scalar_lea.vmem %s1, %s67
    %s69 = sadd.s32 0, 0
    %p70 = scmp.lt.s32.totalorder %s69, 0
    %s71 = scalar_select %p70, %s69, 0
    %s72 = sadd.s32 0, 0
    %p73 = scmp.eq.s32.totalorder 0, 0
    // Predicated region
    $region18: #{tpu_custom_call.1} parent=1 // pred_check
      %p74 = pneg %p73
    $region19: #{tpu_custom_call.1} parent=1 // pred_check_branch
      %76 = sbr.rel (%p74) target = $region21
    $region20: #{tpu_custom_call.1} parent=1 // pred_region
      %vm77 = vcmask 261120
      %78 = vst.msk [vmem:[#allocation2] sm:$0xff] %vm77, 0.0
    $region21: #{tpu_custom_call.1} parent=1 // pred_fallthru
      _
    %v79 = vld [vmem:[%s58] sm:$0xff]
    %v80 = vld [vmem:[%s2] sm:$0xff]
    %v81 = vld [vmem:[%s2 + $0x8] sm:$0xff]
    %v82 = vld [vmem:[%s2 + $0x10] sm:$0xff]
    %v83 = vld [vmem:[%s2 + $0x18] sm:$0xff]
    %v84 = vld [vmem:[%s2 + $0x20] sm:$0xff]
    %v85 = vld [vmem:[%s2 + $0x28] sm:$0xff]
    %v86 = vld [vmem:[%s2 + $0x30] sm:$0xff]
    %v87 = vld [vmem:[%s2 + $0x38] sm:$0xff]
    %v88 = vld [vmem:[%s2 + $0x40] sm:$0xff]
    %v89 = vld [vmem:[%s2 + $0x48] sm:$0xff]
    %v90 = vld [vmem:[%s2 + $0x50] sm:$0xff]
    %v91 = vld [vmem:[%s2 + $0x58] sm:$0xff]
    %v92 = vld [vmem:[%s2 + $0x60] sm:$0xff]
    %v93 = vld [vmem:[%s2 + $0x68] sm:$0xff]
    %v94 = vld [vmem:[%s2 + $0x70] sm:$0xff]
    %v95 = vld [vmem:[%s2 + $0x78] sm:$0xff]
    %96 = vmatprep.subr.mxu0 0.0
    %97 = vmatpush1.msra.mxu0 %v80
    %98 = vmatprep.subr.mxu0 0.0
    %99 = vmatpush1.msra.mxu0 %v81
    %100 = vmatprep.subr.mxu0 0.0
    %101 = vmatpush1.msra.mxu0 %v82
    %102 = vmatprep.subr.mxu0 0.0
    %103 = vmatpush1.msra.mxu0 %v83
    %104 = vmatprep.subr.mxu0 0.0
    %105 = vmatpush1.msra.mxu0 %v84
    %106 = vmatprep.subr.mxu0 0.0
    %107 = vmatpush1.msra.mxu0 %v85
    %108 = vmatprep.subr.mxu0 0.0
    %109 = vmatpush1.msra.mxu0 %v86
    %110 = vmatprep.subr.mxu0 0.0
    %111 = vmatpush1.msra.mxu0 %v87
    %112 = vmatprep.subr.mxu0 0.0
    %113 = vmatpush1.msra.mxu0 %v88
    %114 = vmatprep.subr.mxu0 0.0
    %115 = vmatpush1.msra.mxu0 %v89
    %116 = vmatprep.subr.mxu0 0.0
    %117 = vmatpush1.msra.mxu0 %v90
    %118 = vmatprep.subr.mxu0 0.0
    %119 = vmatpush1.msra.mxu0 %v91
    %120 = vmatprep.subr.mxu0 0.0
    %121 = vmatpush1.msra.mxu0 %v92
    %122 = vmatprep.subr.mxu0 0.0
    %123 = vmatpush1.msra.mxu0 %v93
    %124 = vmatprep.subr.mxu0 0.0
    %125 = vmatpush1.msra.mxu0 %v94
    %126 = vmatprep.subr.mxu0 0.0
    %127 = vmatpush1.msra.mxu0 %v95
    %128 = vmatprep.subr.mxu0 0.0
    %129 = vmatpush1.msra.mxu0 0.0
    %130 = vmatprep.subr.mxu0 0.0
    %131 = vmatpush1.msra.mxu0 0.0
    %132 = vmatprep.subr.mxu0 0.0
    %133 = vmatpush1.msra.mxu0 0.0
    %134 = vmatprep.subr.mxu0 0.0
    %135 = vmatpush1.msra.mxu0 0.0
    %136 = vmatprep.subr.mxu0 0.0
    %137 = vmatpush1.msra.mxu0 0.0
    %138 = vmatprep.subr.mxu0 0.0
    %139 = vmatpush1.msra.mxu0 0.0
    %140 = vmatprep.subr.mxu0 0.0
    %141 = vmatpush1.msra.mxu0 0.0
    %142 = vmatprep.subr.mxu0 0.0
    %143 = vmatpush1.msra.mxu0 0.0
    %144 = vmatprep.subr.mxu0 0.0
    %145 = vmatpush1.msra.mxu0 0.0
    %146 = vmatprep.subr.mxu0 0.0
    %147 = vmatpush1.msra.mxu0 0.0
    %148 = vmatprep.subr.mxu0 0.0
    %149 = vmatpush1.msra.mxu0 0.0
    %150 = vmatprep.subr.mxu0 0.0
    %151 = vmatpush1.msra.mxu0 0.0
    %152 = vmatprep.subr.mxu0 0.0
    %153 = vmatpush1.msra.mxu0 0.0
    %154 = vmatprep.subr.mxu0 0.0
    %155 = vmatpush1.msra.mxu0 0.0
    %156 = vmatprep.subr.mxu0 0.0
    %157 = vmatpush1.msra.mxu0 0.0
    %158 = vmatprep.subr.mxu0 0.0
    %159 = vmatpush1.msra.mxu0 0.0
    %160 = vmatprep.mubr.f32.mxu0 0.0
    %161 = vmatmul.mubr.f32.gmra.mrb[0].mxu0 %v79
    %v162 = vpop.f32.mrb[0].mxu0
    %v163 = vadd.f32 0.0, %v162
    %v164 = vpop.f32.mrb[0].mxu0
    %165 = vdwg.mxu0
    %v166 = vsub.f32 %v79, %v163
    %v167 = vmin.f32 %v166, 80.0
    %v168 = vmul.f32 %v167, 1.442695
    %v169 = vpow.pop %v168
    %v170 = vld [vmem:[%s3] sm:$0xff]
    %v171 = vld [vmem:[%s3 + $0x8] sm:$0xff]
    %v172 = vld [vmem:[%s3 + $0x10] sm:$0xff]
    %v173 = vld [vmem:[%s3 + $0x18] sm:$0xff]
    %v174 = vld [vmem:[%s3 + $0x20] sm:$0xff]
    %v175 = vld [vmem:[%s3 + $0x28] sm:$0xff]
    %v176 = vld [vmem:[%s3 + $0x30] sm:$0xff]
    %v177 = vld [vmem:[%s3 + $0x38] sm:$0xff]
    %v178 = vld [vmem:[%s3 + $0x40] sm:$0xff]
    %v179 = vld [vmem:[%s3 + $0x48] sm:$0xff]
    %v180 = vld [vmem:[%s3 + $0x50] sm:$0xff]
    %v181 = vld [vmem:[%s3 + $0x58] sm:$0xff]
    %v182 = vld [vmem:[%s3 + $0x60] sm:$0xff]
    %v183 = vld [vmem:[%s3 + $0x68] sm:$0xff]
    %v184 = vld [vmem:[%s3 + $0x70] sm:$0xff]
    %v185 = vld [vmem:[%s3 + $0x78] sm:$0xff]
    %186 = vmatprep.subr.mxu0 0.0
    %187 = vmatpush1.msra.mxu0 %v170
    %188 = vmatprep.subr.mxu0 0.0
    %189 = vmatpush1.msra.mxu0 %v171
    %190 = vmatprep.subr.mxu0 0.0
    %191 = vmatpush1.msra.mxu0 %v172
    %192 = vmatprep.subr.mxu0 0.0
    %193 = vmatpush1.msra.mxu0 %v173
    %194 = vmatprep.subr.mxu0 0.0
    %195 = vmatpush1.msra.mxu0 %v174
    %196 = vmatprep.subr.mxu0 0.0
    %197 = vmatpush1.msra.mxu0 %v175
    %198 = vmatprep.subr.mxu0 0.0
    %199 = vmatpush1.msra.mxu0 %v176
    %200 = vmatprep.subr.mxu0 0.0
    %201 = vmatpush1.msra.mxu0 %v177
    %202 = vmatprep.subr.mxu0 0.0
    %203 = vmatpush1.msra.mxu0 %v178
    %204 = vmatprep.subr.mxu0 0.0
    %205 = vmatpush1.msra.mxu0 %v179
    %206 = vmatprep.subr.mxu0 0.0
    %207 = vmatpush1.msra.mxu0 %v180
    %208 = vmatprep.subr.mxu0 0.0
    %209 = vmatpush1.msra.mxu0 %v181
    %210 = vmatprep.subr.mxu0 0.0
    %211 = vmatpush1.msra.mxu0 %v182
    %212 = vmatprep.subr.mxu0 0.0
    %213 = vmatpush1.msra.mxu0 %v183
    %214 = vmatprep.subr.mxu0 0.0
    %215 = vmatpush1.msra.mxu0 %v184
    %216 = vmatprep.subr.mxu0 0.0
    %217 = vmatpush1.msra.mxu0 %v185
    %218 = vmatprep.subr.mxu0 0.0
    %219 = vmatpush1.msra.mxu0 0.0
    %220 = vmatprep.subr.mxu0 0.0
    %221 = vmatpush1.msra.mxu0 0.0
    %222 = vmatprep.subr.mxu0 0.0
    %223 = vmatpush1.msra.mxu0 0.0
    %224 = vmatprep.subr.mxu0 0.0
    %225 = vmatpush1.msra.mxu0 0.0
    %226 = vmatprep.subr.mxu0 0.0
    %227 = vmatpush1.msra.mxu0 0.0
    %228 = vmatprep.subr.mxu0 0.0
    %229 = vmatpush1.msra.mxu0 0.0
    %230 = vmatprep.subr.mxu0 0.0
    %231 = vmatpush1.msra.mxu0 0.0
    %232 = vmatprep.subr.mxu0 0.0
    %233 = vmatpush1.msra.mxu0 0.0
    %234 = vmatprep.subr.mxu0 0.0
    %235 = vmatpush1.msra.mxu0 0.0
    %236 = vmatprep.subr.mxu0 0.0
    %237 = vmatpush1.msra.mxu0 0.0
    %238 = vmatprep.subr.mxu0 0.0
    %239 = vmatpush1.msra.mxu0 0.0
    %240 = vmatprep.subr.mxu0 0.0
    %241 = vmatpush1.msra.mxu0 0.0
    %242 = vmatprep.subr.mxu0 0.0
    %243 = vmatpush1.msra.mxu0 0.0
    %244 = vmatprep.subr.mxu0 0.0
    %245 = vmatpush1.msra.mxu0 0.0
    %246 = vmatprep.subr.mxu0 0.0
    %247 = vmatpush1.msra.mxu0 0.0
    %248 = vmatprep.subr.mxu0 0.0
    %249 = vmatpush1.msra.mxu0 0.0
    %250 = vmatprep.mubr.f32.mxu0 0.0
    %251 = vmatmul.mubr.f32.gmra.mrb[0].mxu0 %v169
    %v252 = vpop.f32.mrb[0].mxu0
    %v253 = vadd.f32 0.0, %v252
    %v254 = vpop.f32.mrb[0].mxu0
    %255 = vdwg.mxu0
    %v256 = vrcp.pop %v253
    %v257 = vmul.f32 %v253, %v256
    %v258 = vsub.f32 2.0, %v257
    %v259 = vmul.f32 %v256, %v258
    %v260 = vld [vmem:[%s68] sm:$0xff]
    %v261 = vsub.f32 %v260, %v259
    %v262 = vand.u32 2147483647, %v261
    %vm263 = vcmp.lt.f32.partialorder %v262, 10.0
    %v264 = vmul.f32 %v262, 0.5
    %v265 = vadd.f32 %v264, 1.0
    %v266 = vlog2.pop %v265
    %v267 = vmul.f32 %v266, 0.6931472
    %v268 = vmul.f32 %v267, 10.0
    %v269 = vsub.f32 %v262, -7.917595
    %v270 = vsel %vm263, %v268, %v269
    %p271 = scmp.lt.s32.totalorder %s72, 0
    // Predicated region
    $region22: #{tpu_custom_call.1} parent=1 // pred_check
      %p272 = pneg %p271
    $region23: #{tpu_custom_call.1} parent=1 // pred_check_branch
      %274 = sbr.rel (%p272) target = $region25
    $region24: #{tpu_custom_call.1} parent=1 // pred_region
      %v275 = vld [vmem:[#allocation2] sm:$0xff]
      %v276 = vadd.f32 %v275, %v270
      %vm277 = vcmask 261120
      %278 = vst.msk [vmem:[#allocation2] sm:$0xff] %vm277, %v276
    $region25: #{tpu_custom_call.1} parent=1 // pred_fallthru
      _
    %p279 = scmp.eq.s32.totalorder %s72, 0
    // Predicated region
    $region26: #{tpu_custom_call.1} parent=1 // pred_check
      %p280 = pneg %p279
    $region27: #{tpu_custom_call.1} parent=1 // pred_check_branch
      %282 = sbr.rel (%p280) target = $region29
    $region28: #{tpu_custom_call.1} parent=1 // pred_region
      %v283 = vlaneseq
      %v284 = vshrl.u32 %v283, 7
      %v285 = vlaneseq
      %v286 = vand.u32 %v285, 127
      %v287 = vmul.u32 %v284, 32
      %v288 = vadd.s32 %v287, %v286
      %v289 = vld [vmem:[#allocation2] sm:$0xff]
      %vm290 = vcmp.lt.s32.totalorder %v288, 8
      %v291 = vsel %vm290, %v270, 0.0
      %v292 = vadd.f32 %v289, %v291
      %vm293 = vcmask 261120
      %294 = vst.msk [vmem:[#allocation2] sm:$0xff] %vm293, %v292
    $region29: #{tpu_custom_call.1} parent=1 // pred_fallthru
      _
    // Predicated region
    $region30: #{tpu_custom_call.1} parent=1 // pred_check
      %p295 = pneg %p73
    $region31: #{tpu_custom_call.1} parent=1 // pred_check_branch
      %297 = sbr.rel (%p295) target = $region33
    $region32: #{tpu_custom_call.1} parent=1 // pred_region
      %v298 = vld [vmem:[#allocation2] sm:$0xff]
      %vm299 = vcmask 261120
      %v300 = vsel %vm299, %v298, 0.0
      %301 = vadd.xlane.f32.xlu0 %v300
      %v302 = vpop.xlane.xlu0 %301
      %v303 = vrot.slane %v302, 4
      %v304 = vadd.f32 %v302, %v303
      %v305 = vrot.slane %v304, 2
      %v306 = vadd.f32 %v304, %v305
      %v307 = vrot.slane %v306, 1
      %v308 = vadd.f32 %v306, %v307
      %s309 = vtos %v308
      %v310 = vstv %s309
      %311 = vst [vmem:[#allocation3] sm:$0xff] %v310
    $region33: #{tpu_custom_call.1} parent=1 // pred_fallthru
      _
    // Predicated region
    $region34: #{tpu_custom_call.1} parent=1 // pred_check
      _
    $region35: #{tpu_custom_call.1} parent=1 // pred_check_branch
      %313 = sbr.rel (0) target = $region37
    $region36: #{tpu_custom_call.1} parent=1 // pred_region
      %s315 = ssub.s32 128, 128
      %316 = vsyncadd [#allocation4], %s315
      %s318 = sshll.u32 [#allocation3], 4
      %s319 = int_to_ptr.vmem [resolvable:$true] %s318
      %321 = dma.vmem_to_hbm [thread:$0]  %s319, 128, %s4, [#allocation4]
    $region37: #{tpu_custom_call.1} parent=1 // pred_fallthru
      _
    // Predicated region
    $region38: #{tpu_custom_call.1} parent=1 // pred_check
      _
    $region39: #{tpu_custom_call.1} parent=1 // pred_check_branch
      %323 = sbr.rel (0) target = $region41
    $region40: #{tpu_custom_call.1} parent=1 // pred_region
      %324 = dma.done [#allocation4], 128
    $region41: #{tpu_custom_call.1} parent=1 // pred_fallthru
      _
    %325 = vsyncpa [#allocation4], 1

</llo_original>
